<compile_context>
chip_gen: v5e
topology: v5e:2x2
jax: 0.10.0
libtpu: 0.0.40
codegen_flags: <defaults>
</compile_context>

<pallas_src>
import functools

import jax
import jax.numpy as jnp
from jax import lax
from jax.experimental import pallas as pl
from jax.experimental.pallas import tpu as pltpu

EPS = 1e-7          # matches cox_ph_loss(eps=1e-07)
LANES = 128         # TPU lane width (samples packed lanes-fast)
SUB_MAX = 128       # rows per in-kernel group (keeps the carry matmul contraction <= 128)
ROW_ALIGN = 16      # sublane alignment (bf16 events pack 16 rows per vreg)


def _npll_kernel(z_ref, ev_ref, tri_ref, tris_ref, out_ref,
                 carry_ref, num_ref, *, sub, groups):
    """One grid step: `groups` row-groups of `sub` rows x 128 lanes each."""
    g = pl.program_id(0)

    @pl.when(g == 0)
    def _init():
        carry_ref[...] = jnp.zeros_like(carry_ref)
        num_ref[...] = jnp.zeros_like(num_ref)

    tri = tri_ref[...]      # (128,128), 1 where j <= c : lane-level inclusive prefix
    tris = tris_ref[...]    # (sub,sub), 1 where r' < r : sublane-level exclusive prefix

    def group_body(i, carry_dummy):
        r0 = pl.multiple_of(i * sub, sub)
        z = z_ref[pl.ds(r0, sub), :]                         # (sub,128) f32
        ev = ev_ref[pl.ds(r0, sub), :].astype(jnp.float32)   # bf16 -> f32 (0/1 exact)
        h = jnp.exp(z)                                       # exp(log_h - gamma) <= 1

        # Lane-level inclusive prefix sum within each row (one MXU tile-op per
        # 128x128 samples).  Mosaic lowers this f32 x f32 dot with full-f32
        # multi-pass MXU accumulation (verified to 1e-5 vs the f32 reference).
        cs_intra = jnp.dot(h, tri, preferred_element_type=jnp.float32)

        # Sublane-level carry inside the group: below[r,c] = sum_{r'<r} h[r',c].
        # The contraction is capped at sub<=128 rows, so this is ~1 MXU tile-op
        # per sample tile; the remaining lane reduce on (sub,128) is cheap XLU.
        below = jnp.dot(tris, h, preferred_element_type=jnp.float32)
        row_excl = jnp.sum(below, axis=1, keepdims=True)     # (sub,1)

        cs = cs_intra + row_excl + carry_ref[...]            # (sub,128) running cumsum
        log_cs = jnp.log(cs + EPS)

        # Accumulate the numerator into a (sub,128) VPU slab; it is collapsed
        # to a scalar only once, in the finalize branch.
        num_ref[...] += (z - log_cs) * ev

        # Running carry = inclusive cumsum at the last element of this group.
        # (Plain f32 carry; a Kahan-style compensated carry would only matter
        # for N in the millions.)
        carry_ref[...] = cs[sub - 1:sub, LANES - 1:LANES]
        return carry_dummy

    lax.fori_loop(0, groups, group_body, 0, unroll=(groups <= 8))

    @pl.when(g == pl.num_programs(0) - 1)
    def _finalize():
        out_ref[...] = jnp.sum(num_ref[...], axis=(0, 1), keepdims=True)


def approximate_npll_loss(log_h, durations, events, *, max_block_rows=2048):
    """JAX/Pallas equivalent of approximateNpllLoss.forward(input, target, weight).

    input  -> log_h      (per-sample log-hazard scores)
    target -> durations
    weight -> events     (0/1 event indicators)
    """
    log_h = jnp.asarray(log_h).reshape(-1).astype(jnp.float32)
    durations = jnp.asarray(durations).reshape(-1).astype(jnp.float32)
    events_f = jnp.asarray(events).reshape(-1).astype(jnp.float32)
    n = log_h.shape[0]

    # TODO(synk): the data-dependent argsort/gather (risk-set ordering) has no
    # clean in-kernel Pallas equivalent; it stays in plain JAX glue.  gamma is
    # folded into z = log_h - gamma (it cancels inside log_h - log_cumsum_h)
    # and den = sum(events) is permutation-invariant, so both are computed here
    # instead of burning per-grid-step XLU reductions in the kernel.
    idx = jnp.argsort(-durations)                 # descending durations
    gamma = jnp.max(log_h)
    z = log_h[idx] - gamma
    ev = events_f[idx]
    den = jnp.sum(events_f)

    # --- tiling -------------------------------------------------------------
    rows = -(-n // LANES)                                    # samples packed (rows,128)
    if rows <= SUB_MAX:
        sub = max(ROW_ALIGN, -(-rows // ROW_ALIGN) * ROW_ALIGN)
    else:
        sub = SUB_MAX
    rows_sub = -(-rows // sub) * sub                         # multiple of sub
    groups = min(max(1, int(max_block_rows) // sub), rows_sub // sub)
    block_rows = groups * sub                                # rows per grid step
    nblocks = -(-rows_sub // block_rows)
    rows_pad = nblocks * block_rows
    total = rows_pad * LANES

    # Padding: z=0 (h=1) only affects the cumsum at padded positions (which all
    # come after every real sample) and the unused final carry; ev=0 zeroes
    # their num contribution, so no masking is needed inside the kernel.
    z = jnp.pad(z, (0, total - n)).reshape(rows_pad, LANES)
    ev = jnp.pad(ev, (0, total - n)).reshape(rows_pad, LANES).astype(jnp.bfloat16)

    # 0/1 prefix-sum constants, built once and fetched once (constant block index).
    tri = jnp.triu(jnp.ones((LANES, LANES), jnp.float32))             # j <= c
    tri_strict = jnp.tril(jnp.ones((sub, sub), jnp.float32), k=-1)    # r' < r

    # z + ev double-buffered, plus the two small constants and the num slab.
    vmem_est = (2 * (block_rows * LANES * 4 + block_rows * LANES * 2
                     + LANES * LANES * 4 + sub * sub * 4)
                + sub * LANES * 4)
    vmem_limit = int(min(64 << 20, max(32 << 20, vmem_est + (4 << 20))))

    kernel = functools.partial(_npll_kernel, sub=sub, groups=groups)

    num = pl.pallas_call(
        kernel,
        out_shape=jax.ShapeDtypeStruct((1, 1), jnp.float32),
        grid=(nblocks,),
        in_specs=[
            pl.BlockSpec((block_rows, LANES), lambda g: (g, 0)),   # z
            pl.BlockSpec((block_rows, LANES), lambda g: (g, 0)),   # events (bf16)
            pl.BlockSpec((LANES, LANES), lambda g: (0, 0)),        # tri (lane prefix)
            pl.BlockSpec((sub, sub), lambda g: (0, 0)),            # tri_strict (row prefix)
        ],
        out_specs=pl.BlockSpec((1, 1), lambda g: (0, 0)),
        scratch_shapes=[pltpu.VMEM((1, 1), jnp.float32),           # running carry
                        pltpu.VMEM((sub, LANES), jnp.float32)],    # num accumulator slab
        compiler_params=pltpu.CompilerParams(
            dimension_semantics=("arbitrary",),   # sequential: running cumsum carry
            vmem_limit_bytes=vmem_limit),
    )(z, ev, tri, tri_strict)

    loss = -(num[0, 0] / den)
    # PyTorch wrapper: nan or -inf  ->  +inf
    return jnp.where(jnp.isnan(loss) | jnp.isneginf(loss), jnp.inf, loss)


def _reference_npll(log_h, durations, events):
    """Pure-JAX reference (mirrors pycox cox_ph_loss) for a correctness check."""
    log_h = log_h.reshape(-1).astype(jnp.float32)
    idx = jnp.argsort(-durations.reshape(-1).astype(jnp.float32))
    log_h = log_h[idx]
    ev = events.reshape(-1).astype(jnp.float32)[idx]
    gamma = jnp.max(log_h)
    log_cumsum_h = jnp.log(jnp.cumsum(jnp.exp(log_h - gamma)) + EPS) + gamma
    res = -jnp.sum((log_h - log_cumsum_h) * ev) / jnp.sum(ev)
    return jnp.where(jnp.isnan(res) | jnp.isneginf(res), jnp.inf, res)


if __name__ == "__main__":
    key = jax.random.PRNGKey(0)
    k1, k2, k3 = jax.random.split(key, 3)

    # input: per-sample log-hazard scores, target: durations, weight: events.
    N = 300
    log_h = jax.random.normal(k1, (N,), dtype=jnp.float32)
    durations = jax.random.uniform(k2, (N,), dtype=jnp.float32, minval=0.0, maxval=10.0)
    events = (jax.random.uniform(k3, (N,)) < 0.7).astype(jnp.float32)

    loss = approximate_npll_loss(log_h, durations, events)
    jax.block_until_ready(loss)
    ref = _reference_npll(log_h, durations, events)
    assert jnp.allclose(loss, ref, rtol=1e-5, atol=1e-5), (loss, ref)

    # Larger case: exercises the in-block group loop (groups=2) and the
    # cross-block grid carry (2 sequential grid steps).  rtol is loosened to
    # 1e-4 because f32 reduction order differs from the pure-JAX reference.
    N2 = 40000
    k4, k5, k6 = jax.random.split(jax.random.PRNGKey(1), 3)
    log_h2 = jax.random.normal(k4, (N2,), dtype=jnp.float32)
    durations2 = jax.random.uniform(k5, (N2,), dtype=jnp.float32, minval=0.0, maxval=10.0)
    events2 = (jax.random.uniform(k6, (N2,)) < 0.7).astype(jnp.float32)

    loss2 = approximate_npll_loss(log_h2, durations2, events2, max_block_rows=256)
    jax.block_until_ready(loss2)
    ref2 = _reference_npll(log_h2, durations2, events2)
    assert jnp.allclose(loss2, ref2, rtol=1e-4, atol=1e-5), (loss2, ref2)

    # Default tiling path on the same data (single grid step, 3 groups).
    loss3 = approximate_npll_loss(log_h2, durations2, events2)
    jax.block_until_ready(loss3)
    assert jnp.allclose(loss3, ref2, rtol=1e-4, atol=1e-5), (loss3, ref2)

    print("KERNEL_OK")
</pallas_src>

<mosaic_0001>
module attributes {stable_mosaic.version = 11 : i64} {
  func.func @_npll_kernel(%arg0: i32, %arg1: memref<16x128xf32, #tpu.memory_space<vmem>>, %arg2: memref<16x128xbf16, #tpu.memory_space<vmem>>, %arg3: memref<128x128xf32, #tpu.memory_space<vmem>>, %arg4: memref<16x16xf32, #tpu.memory_space<vmem>>, %arg5: memref<1x1xf32, #tpu.memory_space<vmem>>, %arg6: memref<1x1xf32, #tpu.memory_space<vmem>>, %arg7: memref<16x128xf32, #tpu.memory_space<vmem>>) attributes {dimension_semantics = [#tpu.dimension_semantics<arbitrary>], iteration_bounds = array<i64: 1>, scalar_prefetch = 0 : i64, scratch_operands = 2 : i64, tpu.core_type = #tpu.core_type<tc>, window_params = [{transform_indices = @transform_0, window_bounds = array<i64: 16, 128>}, {transform_indices = @transform_1, window_bounds = array<i64: 16, 128>}, {pipeline_mode = #tpu.pipeline_mode<synchronous>, transform_indices = @transform_2, window_bounds = array<i64: 128, 128>}, {pipeline_mode = #tpu.pipeline_mode<synchronous>, transform_indices = @transform_3, window_bounds = array<i64: 16, 16>}, {pipeline_mode = #tpu.pipeline_mode<synchronous>, transform_indices = @transform_4, window_bounds = array<i64: 1, 1>}]} {
    %c0_i32 = arith.constant 0 : i32
    %0 = arith.cmpi eq, %arg0, %c0_i32 : i32
    %1 = arith.extui %0 : i1 to i32
    %c0_i32_0 = arith.constant 0 : i32
    %2 = arith.cmpi ne, %1, %c0_i32_0 : i32
    scf.if %2 {
      %cst_20 = arith.constant 0.000000e+00 : f32
      %35 = vector.broadcast %cst_20 : f32 to vector<1x1xf32>
      %c0_21 = arith.constant 0 : index
      %c0_22 = arith.constant 0 : index
      %36 = vector.load %arg6[%c0_21, %c0_22] : memref<1x1xf32, #tpu.memory_space<vmem>>, vector<1x1xf32>
      tpu.vector_store %arg6[%c0_21, %c0_22], %35 {strides = array<i32>} : memref<1x1xf32, #tpu.memory_space<vmem>>, vector<1x1xf32>,
      %cst_23 = arith.constant 0.000000e+00 : f32
      %37 = vector.broadcast %cst_23 : f32 to vector<16x128xf32>
      %c0_24 = arith.constant 0 : index
      %c0_25 = arith.constant 0 : index
      %38 = vector.load %arg7[%c0_24, %c0_25] : memref<16x128xf32, #tpu.memory_space<vmem>>, vector<16x128xf32>
      tpu.vector_store %arg7[%c0_24, %c0_25], %37 {strides = array<i32>} : memref<16x128xf32, #tpu.memory_space<vmem>>, vector<16x128xf32>,
    } else {
    }
    %c0 = arith.constant 0 : index
    %c0_1 = arith.constant 0 : index
    %3 = vector.load %arg3[%c0, %c0_1] : memref<128x128xf32, #tpu.memory_space<vmem>>, vector<128x128xf32>
    %c0_2 = arith.constant 0 : index
    %c0_3 = arith.constant 0 : index
    %4 = vector.load %arg4[%c0_2, %c0_3] : memref<16x16xf32, #tpu.memory_space<vmem>>, vector<16x16xf32>
    %c0_i32_4 = arith.constant 0 : i32
    %c16_i32 = arith.constant 16 : i32
    %5 = arith.muli %c0_i32_4, %c16_i32 : i32
    %6 = tpu.assume_multiple %5, 16 : i32
    %7 = arith.index_cast %6 : i32 to index
    %c0_5 = arith.constant 0 : index
    %8 = vector.load %arg1[%7, %c0_5] : memref<16x128xf32, #tpu.memory_space<vmem>>, vector<16x128xf32>
    %9 = arith.index_cast %6 : i32 to index
    %c0_6 = arith.constant 0 : index
    %10 = vector.load %arg2[%9, %c0_6] : memref<16x128xbf16, #tpu.memory_space<vmem>>, vector<16x128xbf16>
    %11 = arith.extf %10 : vector<16x128xbf16> to vector<16x128xf32>
    %12 = math.exp %8 : vector<16x128xf32>
    %cst = arith.constant dense<0.000000e+00> : vector<16x128xf32>
    %13 = tpu.matmul %12, %3, %cst {dimension_numbers = #tpu.dot_dimension_numbers<[1], [0], [0], [1], [0, 0, 1, 1], [], []>} : vector<16x128xf32>, vector<128x128xf32>, vector<16x128xf32> -> vector<16x128xf32>
    %cst_7 = arith.constant dense<0.000000e+00> : vector<16x128xf32>
    %14 = tpu.matmul %4, %12, %cst_7 {dimension_numbers = #tpu.dot_dimension_numbers<[1], [0], [0], [1], [0, 0, 1, 1], [], []>} : vector<16x16xf32>, vector<16x128xf32>, vector<16x128xf32> -> vector<16x128xf32>
    %cst_8 = arith.constant dense<0.000000e+00> : vector<16xf32>
    %15 = vector.multi_reduction <add>, %14, %cst_8 [1] : vector<16x128xf32> to vector<16xf32>
    %16 = vector.shape_cast %15 : vector<16xf32> to vector<16x1xf32>
    %17 = vector.broadcast %16 : vector<16x1xf32> to vector<16x128xf32>
    %18 = arith.addf %13, %17 : vector<16x128xf32>
    %c0_9 = arith.constant 0 : index
    %c0_10 = arith.constant 0 : index
    %19 = vector.load %arg6[%c0_9, %c0_10] : memref<1x1xf32, #tpu.memory_space<vmem>>, vector<1x1xf32>
    %20 = vector.broadcast %19 : vector<1x1xf32> to vector<16x128xf32>
    %21 = arith.addf %18, %20 : vector<16x128xf32>
    %cst_11 = arith.constant 1.000000e-07 : f32
    %22 = vector.broadcast %cst_11 : f32 to vector<16x128xf32>
    %23 = arith.addf %21, %22 : vector<16x128xf32>
    %24 = math.log %23 : vector<16x128xf32>
    %c0_12 = arith.constant 0 : index
    %c0_13 = arith.constant 0 : index
    %25 = vector.load %arg7[%c0_12, %c0_13] : memref<16x128xf32, #tpu.memory_space<vmem>>, vector<16x128xf32>
    %26 = arith.subf %8, %24 : vector<16x128xf32>
    %27 = arith.mulf %26, %11 : vector<16x128xf32>
    %28 = arith.addf %25, %27 : vector<16x128xf32>
    %c0_14 = arith.constant 0 : index
    %c0_15 = arith.constant 0 : index
    %29 = vector.load %arg7[%c0_14, %c0_15] : memref<16x128xf32, #tpu.memory_space<vmem>>, vector<16x128xf32>
    tpu.vector_store %arg7[%c0_14, %c0_15], %28 {strides = array<i32>} : memref<16x128xf32, #tpu.memory_space<vmem>>, vector<16x128xf32>,
    %30 = vector.extract_strided_slice %21 {offsets = [15, 127], sizes = [1, 1], strides = [1, 1]} : vector<16x128xf32> to vector<1x1xf32>
    %c0_16 = arith.constant 0 : index
    %c0_17 = arith.constant 0 : index
    %31 = vector.load %arg6[%c0_16, %c0_17] : memref<1x1xf32, #tpu.memory_space<vmem>>, vector<1x1xf32>
    tpu.vector_store %arg6[%c0_16, %c0_17], %30 {strides = array<i32>} : memref<1x1xf32, #tpu.memory_space<vmem>>, vector<1x1xf32>,
    %c1_i32 = arith.constant 1 : i32
    %c0_i32_18 = arith.constant 0 : i32
    %32 = arith.cmpi eq, %arg0, %c0_i32_18 : i32
    %33 = arith.extui %32 : i1 to i32
    %c0_i32_19 = arith.constant 0 : i32
    %34 = arith.cmpi ne, %33, %c0_i32_19 : i32
    scf.if %34 {
      %c0_20 = arith.constant 0 : index
      %c0_21 = arith.constant 0 : index
      %35 = vector.load %arg7[%c0_20, %c0_21] : memref<16x128xf32, #tpu.memory_space<vmem>>, vector<16x128xf32>
      %36 = vector.shape_cast %35 : vector<16x128xf32> to vector<1x16x128xf32>
      %cst_22 = arith.constant dense<0.000000e+00> : vector<1xf32>
      %37 = vector.multi_reduction <add>, %36, %cst_22 [1, 2] : vector<1x16x128xf32> to vector<1xf32>
      %38 = vector.shape_cast %37 : vector<1xf32> to vector<1x1x1xf32>
      %39 = vector.extract %38[0, 0, 0] : f32 from vector<1x1x1xf32>
      %40 = vector.broadcast %39 : f32 to vector<1x1xf32>
      %c0_23 = arith.constant 0 : index
      %c0_24 = arith.constant 0 : index
      %41 = vector.load %arg5[%c0_23, %c0_24] : memref<1x1xf32, #tpu.memory_space<vmem>>, vector<1x1xf32>
      tpu.vector_store %arg5[%c0_23, %c0_24], %40 {strides = array<i32>} : memref<1x1xf32, #tpu.memory_space<vmem>>, vector<1x1xf32>,
    } else {
    }
    return
  }
  func.func @transform_0(%arg0: i32) -> (i32, i32) {
    %c0_i32 = arith.constant 0 : i32
    %c0_i32_0 = arith.constant 0 : i32
    return %arg0, %c0_i32 : i32, i32
  }
  func.func @transform_1(%arg0: i32) -> (i32, i32) {
    %c0_i32 = arith.constant 0 : i32
    %c0_i32_0 = arith.constant 0 : i32
    return %arg0, %c0_i32 : i32, i32
  }
  func.func @transform_2(%arg0: i32) -> (i32, i32) {
    %c0_i32 = arith.constant 0 : i32
    %c0_i32_0 = arith.constant 0 : i32
    %c0_i32_1 = arith.constant 0 : i32
    return %c0_i32, %c0_i32_0 : i32, i32
  }
  func.func @transform_3(%arg0: i32) -> (i32, i32) {
    %c0_i32 = arith.constant 0 : i32
    %c0_i32_0 = arith.constant 0 : i32
    %c0_i32_1 = arith.constant 0 : i32
    return %c0_i32, %c0_i32_0 : i32, i32
  }
  func.func @transform_4(%arg0: i32) -> (i32, i32) {
    %c0_i32 = arith.constant 0 : i32
    %c0_i32_0 = arith.constant 0 : i32
    %c0_i32_1 = arith.constant 0 : i32
    return %c0_i32, %c0_i32_0 : i32, i32
  }
}

</mosaic_0001>

<llo_original>
// kernel: tpu_custom_call.1
$region0: #{tpu_custom_call.1}
  #allocation0 [shape = 'u32[]', space=smem, size = 0x4, offset = 0x4, fixed_abs, tag = 'smem constant byte address 0x4 - core index']
  #allocation1 [shape = 'u32[72,128]{1,0:T(1,128)}', space=vmem, size = 0x9000, scoped, tag = 'internal scratch']
  #allocation2 [shape = 'f32[1,1]{1,0:T(1,128)}', space=vmem, size = 0x200, scoped, tag = 'scratch operand']
  #allocation3 [shape = 'f32[16,128]{1,0:T(8,128)}', space=vmem, size = 0x2000, scoped, tag = 'scratch operand']
  %s0 = inlined_call_operand.hbm [shape: f32[16,128], index: 0, kind: input, shape index: {}]
  %s1 = inlined_call_operand.hbm [shape: bf16[16,128], index: 1, kind: input, shape index: {}]
  %s2 = inlined_call_operand.hbm [shape: f32[128,128], index: 2, kind: input, shape index: {}]
  %s3 = inlined_call_operand.hbm [shape: f32[16,16], index: 3, kind: input, shape index: {}]
  %s4 = inlined_call_operand.hbm [shape: f32[1,1], index: 4, kind: output, shape index: {}]
  %s5 = sld [smem:[#allocation0]]
  $region50: #{tpu_custom_call.1} parent=0
    _
  %s7 = ssub.s32 1, %s5
  %s8 = scalar_select 0, %s7, %s5
  $region1: #{tpu_custom_call.1} parent=0
    #allocation4 [shape = 'u8[8192]{0}', space=vmem, size = 0x2000, scoped, tag = 'input window, operand 0, single buffered']
    #allocation5 [shape = 's32[1]{0}', space=sflag, size = 0x4, scoped, tag = 'scoped memory for tpu_custom_call.1']
    #allocation6 [shape = 's32[1]{0}', space=sflag, size = 0x4, scoped, tag = 'scoped memory for tpu_custom_call.1']
    #allocation7 [shape = 'u8[4096]{0}', space=vmem, size = 0x1000, scoped, tag = 'input window, operand 1, single buffered']
    #allocation8 [shape = 's32[1]{0}', space=sflag, size = 0x4, scoped, tag = 'scoped memory for tpu_custom_call.1']
    #allocation9 [shape = 'u8[65536]{0}', space=vmem, size = 0x10000, scoped, tag = 'input window, operand 2, single buffered']
    #allocation10 [shape = 'u8[8192]{0}', space=vmem, size = 0x2000, scoped, tag = 'input window, operand 3, single buffered']
    #allocation11 [shape = 's32[1]{0}', space=sflag, size = 0x4, scoped, tag = 'scoped memory for tpu_custom_call.1']
    #allocation12 [shape = 'u8[512]{0}', space=vmem, size = 0x400, scoped, tag = 'output window, operand 0, single buffered']
    %9 = vsyncpa [#allocation5], 0
    %10 = vsyncpa [#allocation8], 0
    %11 = vsyncpa [#allocation11], 0
    %12 = vsyncpa [#allocation6], 0
    // Predicated region
    $region2: #{tpu_custom_call.1} parent=1 // pred_check
      _
    $region3: #{tpu_custom_call.1} parent=1 // pred_check_branch
      %14 = sbr.rel (0) target = $region5
    $region4: #{tpu_custom_call.1} parent=1 // pred_region
      %16 = vsyncadd [#allocation5], 0
      %s17 = sshll.u32 %s0, 4
      %s18 = int_to_ptr.hbm [resolvable:$true] %s17
      %s19 = sshll.u32 [#allocation4], 4
      %s20 = int_to_ptr.vmem [resolvable:$true] %s19
      %25 = dma.hbm_to_vmem [thread:$0]  %s18, 256, %s20, [#allocation5], 128, 128, 8
    $region5: #{tpu_custom_call.1} parent=1 // pred_fallthru
      _
    // Predicated region
    $region6: #{tpu_custom_call.1} parent=1 // pred_check
      _
    $region7: #{tpu_custom_call.1} parent=1 // pred_check_branch
      %27 = sbr.rel (0) target = $region9
    $region8: #{tpu_custom_call.1} parent=1 // pred_region
      %29 = vsyncadd [#allocation8], 0
      %s30 = sshll.u32 %s1, 4
      %s31 = int_to_ptr.hbm [resolvable:$true] %s30
      %s32 = sshll.u32 [#allocation7], 4
      %s33 = int_to_ptr.vmem [resolvable:$true] %s32
      %38 = dma.hbm_to_vmem [thread:$0]  %s31, 128, %s33, [#allocation8], 64, 64, 4
    $region9: #{tpu_custom_call.1} parent=1 // pred_fallthru
      _
    // Predicated region
    $region10: #{tpu_custom_call.1} parent=1 // pred_check
      _
    $region11: #{tpu_custom_call.1} parent=1 // pred_check_branch
      %40 = sbr.rel (0) target = $region13
    $region12: #{tpu_custom_call.1} parent=1 // pred_region
      %42 = vsyncadd [#allocation8], 0
      %s43 = sshll.u32 %s2, 4
      %s44 = int_to_ptr.hbm [resolvable:$true] %s43
      %s45 = sshll.u32 [#allocation9], 4
      %s46 = int_to_ptr.vmem [resolvable:$true] %s45
      %51 = dma.hbm_to_vmem [thread:$0]  %s44, 2048, %s46, [#allocation8], 128, 128, 8
    $region13: #{tpu_custom_call.1} parent=1 // pred_fallthru
      _
    // Predicated region
    $region14: #{tpu_custom_call.1} parent=1 // pred_check
      _
    $region15: #{tpu_custom_call.1} parent=1 // pred_check_branch
      %53 = sbr.rel (0) target = $region17
    $region16: #{tpu_custom_call.1} parent=1 // pred_region
      %55 = vsyncadd [#allocation11], 0
      %s56 = sshll.u32 %s3, 4
      %s57 = int_to_ptr.hbm [resolvable:$true] %s56
      %s58 = sshll.u32 [#allocation10], 4
      %s59 = int_to_ptr.vmem [resolvable:$true] %s58
      %64 = dma.hbm_to_vmem [thread:$0]  %s57, 256, %s59, [#allocation11], 128, 128, 8
    $region17: #{tpu_custom_call.1} parent=1 // pred_fallthru
      _
    // Predicated region
    $region18: #{tpu_custom_call.1} parent=1 // pred_check
      _
    $region19: #{tpu_custom_call.1} parent=1 // pred_check_branch
      %66 = sbr.rel (0) target = $region21
    $region20: #{tpu_custom_call.1} parent=1 // pred_region
      %68 = dma.done [#allocation5], 256
    $region21: #{tpu_custom_call.1} parent=1 // pred_fallthru
      _
    // Predicated region
    $region22: #{tpu_custom_call.1} parent=1 // pred_check
      _
    $region23: #{tpu_custom_call.1} parent=1 // pred_check_branch
      %70 = sbr.rel (0) target = $region25
    $region24: #{tpu_custom_call.1} parent=1 // pred_region
      %72 = dma.done [#allocation8], 128
    $region25: #{tpu_custom_call.1} parent=1 // pred_fallthru
      _
    // Predicated region
    $region26: #{tpu_custom_call.1} parent=1 // pred_check
      _
    $region27: #{tpu_custom_call.1} parent=1 // pred_check_branch
      %74 = sbr.rel (0) target = $region29
    $region28: #{tpu_custom_call.1} parent=1 // pred_region
      %76 = dma.done [#allocation8], 2048
    $region29: #{tpu_custom_call.1} parent=1 // pred_fallthru
      _
    // Predicated region
    $region30: #{tpu_custom_call.1} parent=1 // pred_check
      _
    $region31: #{tpu_custom_call.1} parent=1 // pred_check_branch
      %78 = sbr.rel (0) target = $region33
    $region32: #{tpu_custom_call.1} parent=1 // pred_region
      %80 = dma.done [#allocation11], 256
    $region33: #{tpu_custom_call.1} parent=1 // pred_fallthru
      _
    %p81 = scmp.eq.s32.totalorder 0, 0
    // Predicated region
    $region34: #{tpu_custom_call.1} parent=1 // pred_check
      %p82 = pneg %p81
    $region35: #{tpu_custom_call.1} parent=1 // pred_check_branch
      %84 = sbr.rel (%p82) target = $region37
    $region36: #{tpu_custom_call.1} parent=1 // pred_region
      %vm85 = vcmask 0
      %86 = vst.msk [vmem:[#allocation2] sm:$0x1] %vm85, 0.0
      %87 = vst [vmem:[#allocation3] sm:$0xff] 0.0
      %88 = vst [vmem:[#allocation3 + $0x8] sm:$0xff] 0.0
    $region37: #{tpu_custom_call.1} parent=1 // pred_fallthru
      _
    %v89 = vld [vmem:[#allocation9] sm:$0xff]
    %v90 = vld [vmem:[#allocation9 + $0x8] sm:$0xff]
    %v91 = vld [vmem:[#allocation9 + $0x10] sm:$0xff]
    %v92 = vld [vmem:[#allocation9 + $0x18] sm:$0xff]
    %v93 = vld [vmem:[#allocation9 + $0x20] sm:$0xff]
    %v94 = vld [vmem:[#allocation9 + $0x28] sm:$0xff]
    %v95 = vld [vmem:[#allocation9 + $0x30] sm:$0xff]
    %v96 = vld [vmem:[#allocation9 + $0x38] sm:$0xff]
    %v97 = vld [vmem:[#allocation9 + $0x40] sm:$0xff]
    %v98 = vld [vmem:[#allocation9 + $0x48] sm:$0xff]
    %v99 = vld [vmem:[#allocation9 + $0x50] sm:$0xff]
    %v100 = vld [vmem:[#allocation9 + $0x58] sm:$0xff]
    %v101 = vld [vmem:[#allocation9 + $0x60] sm:$0xff]
    %v102 = vld [vmem:[#allocation9 + $0x68] sm:$0xff]
    %v103 = vld [vmem:[#allocation9 + $0x70] sm:$0xff]
    %v104 = vld [vmem:[#allocation9 + $0x78] sm:$0xff]
    %v105 = vld [vmem:[#allocation10] sm:$0xff]
    %v106 = vld [vmem:[#allocation10 + $0x8] sm:$0xff]
    %v107 = vld [vmem:[#allocation4] sm:$0xff]
    %v108 = vld [vmem:[#allocation4 + $0x8] sm:$0xff]
    %v109 = vld [vmem:[#allocation7] sm:$0xf]
    %v110 = vld [vmem:[#allocation7 + $0x4] sm:$0xf]
    %v111 = vunpack.c.l.bf16 %v109
    %v112 = vunpack.c.l.bf16 %v110
    %v113 = vmul.f32 %v107, 1.442695
    %v114 = vpow.pop %v113
    %v115 = vmul.f32 %v108, 1.442695
    %v116 = vpow.pop %v115
    %vm117 = vcmask 130048
    %v119 = vsel %vm117, %v105, 0
    %v122 = vsel %vm117, %v106, 0
    %124 = vmatpush.msra.mxu0 0.0
    %125 = vmatpush.msra.mxu0 0.0
    %126 = vmatpush.msra.mxu0 0.0
    %127 = vmatpush.msra.mxu0 0.0
    %128 = vmatpush.msra.mxu0 0.0
    %129 = vmatpush.msra.mxu0 0.0
    %130 = vmatpush.msra.mxu0 0.0
    %131 = vmatpush.msra.mxu0 0.0
    %132 = vmatpush.msra.mxu0 0.0
    %133 = vmatpush.msra.mxu0 0.0
    %134 = vmatpush.msra.mxu0 0.0
    %135 = vmatpush.msra.mxu0 0.0
    %136 = vmatpush.msra.mxu0 0.0
    %137 = vmatpush.msra.mxu0 0.0
    %138 = vmatpush.msra.mxu0 %v116
    %139 = vmatpush.msra.mxu0 %v114
    %140 = vmatmul.f32.gmra.mxu0 %v119
    %v141 = vpop.f32.mrf.mxu0
    %v142 = vadd.f32 0.0, %v141
    %143 = vmatmul.f32.gmra.mxu0 %v122
    %v144 = vpop.f32.mrf.mxu0
    %v145 = vadd.f32 0.0, %v144
    %146 = vdwg.mxu0
    %147 = vadd.xlane.f32.xlu0 %v142
    %v148 = vpop.xlane.xlu0 %147
    %149 = vadd.xlane.f32.xlu0 %v145
    %v150 = vpop.xlane.xlu0 %149
    %151 = vmatpush.msra.mxu0 %v104
    %152 = vmatpush.msra.mxu0 %v103
    %153 = vmatpush.msra.mxu0 %v102
    %154 = vmatpush.msra.mxu0 %v101
    %155 = vmatpush.msra.mxu0 %v100
    %156 = vmatpush.msra.mxu0 %v99
    %157 = vmatpush.msra.mxu0 %v98
    %158 = vmatpush.msra.mxu0 %v97
    %159 = vmatpush.msra.mxu0 %v96
    %160 = vmatpush.msra.mxu0 %v95
    %161 = vmatpush.msra.mxu0 %v94
    %162 = vmatpush.msra.mxu0 %v93
    %163 = vmatpush.msra.mxu0 %v92
    %164 = vmatpush.msra.mxu0 %v91
    %165 = vmatpush.msra.mxu0 %v90
    %166 = vmatpush.msra.mxu0 %v89
    %167 = vmatmul.f32.gmra.mxu0 %v114
    %v168 = vpop.f32.mrf.mxu0
    %v169 = vadd.f32 %v148, %v168
    %170 = vmatmul.f32.gmra.mxu0 %v116
    %v171 = vpop.f32.mrf.mxu0
    %v172 = vadd.f32 %v150, %v171
    %173 = vdwg.mxu0
    %v174 = vld [vmem:[#allocation2] sm:$0x1]
    %v176 = vperm.slane %v174, 0
    %177 = vset.pattern.permute.xlu0 0
    %178 = vperm.xlu0 %177, %v176
    %v179 = vpop.permute.xlu0 %178
    %v181 = vadd.f32 %v169, %v179
    %v182 = vadd.f32 %v172, %v179
    %v183 = vadd.f32 %v181, 1e-07
    %v184 = vadd.f32 %v182, 1e-07
    %v185 = vlog2.pop %v183
    %v186 = vmul.f32 %v185, 0.6931472
    %v187 = vlog2.pop %v184
    %v188 = vmul.f32 %v187, 0.6931472
    %v189 = vld [vmem:[#allocation3] sm:$0xff]
    %v190 = vld [vmem:[#allocation3 + $0x8] sm:$0xff]
    %v191 = vsub.f32 %v107, %v186
    %v192 = vsub.f32 %v108, %v188
    %v193 = vmul.f32 %v191, %v111
    %v194 = vmul.f32 %v192, %v112
    %v195 = vadd.f32 %v189, %v193
    %v196 = vadd.f32 %v190, %v194
    %197 = vst [vmem:[#allocation3] sm:$0xff] %v195
    %198 = vst [vmem:[#allocation3 + $0x8] sm:$0xff] %v196
    %200 = vrot.lane.b32.xlu0 %v182, 1
    %v201 = vpop.permute.xlu0 %200
    %vm203 = vcmask 7175
    %204 = vst.msk [vmem:[#allocation2 - $0x7] sm:$0x80] %vm203, %v201
    // Predicated region
    $region38: #{tpu_custom_call.1} parent=1 // pred_check
      %p205 = pneg %p81
    $region39: #{tpu_custom_call.1} parent=1 // pred_check_branch
      %207 = sbr.rel (%p205) target = $region41
    $region40: #{tpu_custom_call.1} parent=1 // pred_region
      %v208 = vld [vmem:[#allocation3] sm:$0xff]
      %v209 = vld [vmem:[#allocation3 + $0x8] sm:$0xff]
      %v210 = vadd.f32 %v208, %v209
      %211 = vadd.xlane.f32.xlu0 %v210
      %v212 = vpop.xlane.xlu0 %211
      %v213 = vrot.slane %v212, 4
      %v214 = vadd.f32 %v212, %v213
      %v215 = vrot.slane %v214, 2
      %v216 = vadd.f32 %v214, %v215
      %v217 = vrot.slane %v216, 1
      %v218 = vadd.f32 %v216, %v217
      %s219 = vtos %v218
      %v220 = vstv %s219
      %vm221 = vcmask 0
      %222 = vst.msk [vmem:[#allocation12] sm:$0x1] %vm221, %v220
    $region41: #{tpu_custom_call.1} parent=1 // pred_fallthru
      _
    // Predicated region
    $region42: #{tpu_custom_call.1} parent=1 // pred_check
      _
    $region43: #{tpu_custom_call.1} parent=1 // pred_check_branch
      %224 = sbr.rel (0) target = $region45
    $region44: #{tpu_custom_call.1} parent=1 // pred_region
      %226 = vsyncadd [#allocation6], 0
      %s228 = sshll.u32 [#allocation12], 4
      %s229 = int_to_ptr.vmem [resolvable:$true] %s228
      %s230 = sshll.u32 %s4, 4
      %s231 = int_to_ptr.hbm [resolvable:$true] %s230
      %233 = dma.vmem_to_hbm [thread:$0]  %s229, 16, %s231, [#allocation6]
    $region45: #{tpu_custom_call.1} parent=1 // pred_fallthru
      _
    // Predicated region
    $region46: #{tpu_custom_call.1} parent=1 // pred_check
      _
    $region47: #{tpu_custom_call.1} parent=1 // pred_check_branch
      %235 = sbr.rel (0) target = $region49
    $region48: #{tpu_custom_call.1} parent=1 // pred_region
      %237 = dma.done [#allocation6], 16
    $region49: #{tpu_custom_call.1} parent=1 // pred_fallthru
      _
    %238 = vsyncpa [#allocation5], 1
    %239 = vsyncpa [#allocation8], 1
    %240 = vsyncpa [#allocation11], 1
    %241 = vsyncpa [#allocation6], 1

</llo_original>
